<compile_context>
chip_gen: v5e
topology: v5e:2x2
jax: 0.10.0
libtpu: 0.0.40
codegen_flags: <defaults>
</compile_context>

<pallas_src>
import math

import jax
import jax.numpy as jnp
from jax.experimental import pallas as pl
from jax.experimental.pallas import tpu as pltpu

ATTN_HEADS = 4      # nn.MultiheadAttention(embed_dim=in_channels, num_heads=4)
LN_EPS = 1e-5       # nn.LayerNorm default


def coattn_kernel(x_ref, wqkv_ref, bqkv_ref, wom_ref, dvec_ref, o_ref):
    # x_ref block: (B, C, tile_n) — B is the (small, static) attention sequence
    # length, tile_n tokens live in the lane dimension.
    B, C, T = x_ref.shape
    NH = ATTN_HEADS
    dh = C // NH

    x = x_ref[...].astype(jnp.float32)                       # (B, C, T)

    # One shared set of LayerNorm statistics for the Q/K/V pre-norms (same x);
    # the per-norm affine (gamma/beta) is already folded into wqkv/bqkv.
    mu = jnp.mean(x, axis=1, keepdims=True)
    var = jnp.mean((x - mu) ** 2, axis=1, keepdims=True)
    x_hat = (x - mu) * jax.lax.rsqrt(var + LN_EPS)            # (B, C, T)

    # Stack the B sequence positions along the lane axis -> one wide matmul.
    x_cat = jnp.concatenate([x_hat[b] for b in range(B)], axis=-1)   # (C, B*T)

    # Fused QKV projection (LN affine + 1/sqrt(dh) folded in): (3C, C) @ (C, B*T)
    qkv = jnp.dot(wqkv_ref[...], x_cat,
                  preferred_element_type=jnp.float32) + bqkv_ref[...]  # (3C, B*T)

    def head_view(row0, b):
        # (C, T) slab -> per-head (NH, dh, T) view; heads are contiguous channel
        # groups, exactly as in nn.MultiheadAttention.
        return qkv[row0:row0 + C, b * T:(b + 1) * T].reshape(NH, dh, T)

    q = [head_view(0, b) for b in range(B)]
    k = [head_view(C, b) for b in range(B)]
    v = [head_view(2 * C, b) for b in range(B)]

    ctxs = []
    for i in range(B):
        # Per-head, per-token scores of query position i vs every key position j.
        s = [jnp.sum(q[i] * k[j], axis=1) for j in range(B)]          # each (NH, T)
        m = s[0]
        for j in range(1, B):
            m = jnp.maximum(m, s[j])
        e = [jnp.exp(s[j] - m) for j in range(B)]
        denom = e[0]
        for j in range(1, B):
            denom = denom + e[j]
        inv = pl.reciprocal(denom, approx=True)                        # EUP slot

        # Weighted sum of values: broadcast the head weight over its dh channels.
        ctx = (e[0] * inv)[:, None, :] * v[0]
        for j in range(1, B):
            ctx = ctx + (e[j] * inv)[:, None, :] * v[j]
        ctxs.append(ctx.reshape(C, T))

    ctx_cat = jnp.concatenate(ctxs, axis=-1)                           # (C, B*T)

    # Fused attention out-proj + MLP linear: (D, C) @ (C, B*T), then LayerNorm(D).
    b_om = dvec_ref[:, 0:1]
    ln_w = dvec_ref[:, 1:2]
    ln_b = dvec_ref[:, 2:3]
    y = jnp.dot(wom_ref[...], ctx_cat,
                preferred_element_type=jnp.float32) + b_om             # (D, B*T)
    mu_y = jnp.mean(y, axis=0, keepdims=True)
    var_y = jnp.mean((y - mu_y) ** 2, axis=0, keepdims=True)
    y = (y - mu_y) * jax.lax.rsqrt(var_y + LN_EPS) * ln_w + ln_b

    for i in range(B):
        o_ref[i, :, :] = y[:, i * T:(i + 1) * T].astype(o_ref.dtype)


def multi_head_co_attention(x, params, *, tile_n=None):
    B, C, H, W = x.shape
    N = H * W
    D = params["mlp_w"].shape[0]
    NH = ATTN_HEADS
    dh = C // NH
    f32 = jnp.float32

    # Channel-first, tokens in the lane dim — just a reshape, no transpose.
    tokens = x.reshape(B, C, N).astype(f32)                            # (B, C, N)

    if tile_n is None:
        if N % 128 == 0:
            # Largest lane-dense tile (multiple of 128, capped) that keeps the
            # grid >= 2 when possible (so v7x's 2 TensorCores both get work).
            tile_n = 128
            while (N % (2 * tile_n) == 0 and 2 * tile_n <= 512
                   and N // (2 * tile_n) >= 2):
                tile_n *= 2
        else:
            tile_n = N
    assert N % tile_n == 0
    grid = (N // tile_n,)

    # --- exact weight fusions ------------------------------------------------
    wq, wk, wv = jnp.split(params["in_proj_w"].astype(f32), 3, axis=0)  # (C, C) each
    bq, bk, bv = jnp.split(params["in_proj_b"].astype(f32), 3, axis=0)
    scale = 1.0 / math.sqrt(dh)

    def fold_ln(w, b, g, beta, s=1.0):
        # ((x_hat*g + beta) @ w.T + b) * s  ==  x_hat @ (s*w*g).T + s*(w@beta + b)
        g = g.astype(f32)
        beta = beta.astype(f32)
        return (w * g[None, :]) * s, (w @ beta + b) * s

    wq_f, bq_f = fold_ln(wq, bq, params["qn_w"], params["qn_b"], scale)
    wk_f, bk_f = fold_ln(wk, bk, params["kn_w"], params["kn_b"])
    wv_f, bv_f = fold_ln(wv, bv, params["vn_w"], params["vn_b"])

    wqkv = jnp.concatenate([wq_f, wk_f, wv_f], axis=0)                 # (3C, C)
    bqkv = jnp.concatenate([bq_f, bk_f, bv_f], axis=0).reshape(3 * C, 1)

    wo = params["out_proj_w"].astype(f32)                              # (C, C)
    bo = params["out_proj_b"].astype(f32)
    wm = params["mlp_w"].astype(f32)                                   # (D, C)
    bm = params["mlp_b"].astype(f32)
    w_om = wm @ wo                                                     # (D, C)
    b_om = wm @ bo + bm                                                # (D,)

    # Pack all d_model-length vectors as lane-minor columns: [b_om | ln_w | ln_b].
    dvec = jnp.stack([b_om,
                      params["ln_w"].astype(f32),
                      params["ln_b"].astype(f32)], axis=1)             # (D, 3)

    # --- pallas call ----------------------------------------------------------
    bytes_per_step = 4 * (2 * B * (C + D) * tile_n                      # 2x-buffered tiles
                          + 3 * C * C + 3 * C + D * C + 3 * D)          # weights
    vmem_limit = int(min(64 * 1024 * 1024,
                         max(16 * 1024 * 1024, 8 * bytes_per_step)))

    grid_spec = pltpu.PrefetchScalarGridSpec(
        num_scalar_prefetch=0,
        grid=grid,
        in_specs=[
            pl.BlockSpec((B, C, tile_n), lambda n: (0, 0, n)),
            pl.BlockSpec((3 * C, C), lambda n: (0, 0)),
            pl.BlockSpec((3 * C, 1), lambda n: (0, 0)),
            pl.BlockSpec((D, C), lambda n: (0, 0)),
            pl.BlockSpec((D, 3), lambda n: (0, 0)),
        ],
        out_specs=pl.BlockSpec((B, D, tile_n), lambda n: (0, 0, n)),
    )

    out = pl.pallas_call(
        coattn_kernel,
        grid_spec=grid_spec,
        out_shape=jax.ShapeDtypeStruct((B, D, N), jnp.float32),
        compiler_params=pltpu.CompilerParams(
            dimension_semantics=("parallel",),
            vmem_limit_bytes=vmem_limit,
        ),
    )(tokens, wqkv, bqkv, w_om, dvec)

    # (B, D, N) -> (B, D, H, W): pure reshape, no transpose.
    return out.reshape(B, D, H, W)


def reference_forward(x, params):
    """Pure-JAX reference matching the PyTorch module semantics."""
    B, C, H, W = x.shape
    N = H * W
    NH = ATTN_HEADS
    dh = C // NH
    hp = jax.lax.Precision.HIGHEST
    tokens = jnp.transpose(x.reshape(B, C, N), (0, 2, 1))  # (B, N, C)

    def ln(v, w, b):
        mu = jnp.mean(v, -1, keepdims=True)
        var = jnp.mean((v - mu) ** 2, -1, keepdims=True)
        return (v - mu) / jnp.sqrt(var + LN_EPS) * w + b

    qn = ln(tokens, params["qn_w"], params["qn_b"])
    kn = ln(tokens, params["kn_w"], params["kn_b"])
    vn = ln(tokens, params["vn_w"], params["vn_b"])

    wq, wk, wv = jnp.split(params["in_proj_w"], 3, axis=0)
    bq, bk, bv = jnp.split(params["in_proj_b"], 3, axis=0)
    q = jnp.einsum("bnc,dc->bnd", qn, wq, precision=hp) + bq
    k = jnp.einsum("bnc,dc->bnd", kn, wk, precision=hp) + bk
    v = jnp.einsum("bnc,dc->bnd", vn, wv, precision=hp) + bv

    # nn.MultiheadAttention with batch_first=False: seq axis = B, batch axis = N
    qh = q.reshape(B, N, NH, dh)
    kh = k.reshape(B, N, NH, dh)
    vh = v.reshape(B, N, NH, dh)
    scores = jnp.einsum("inhd,jnhd->nhij", qh, kh, precision=hp) / math.sqrt(dh)
    attn = jax.nn.softmax(scores, axis=-1)
    ctx = jnp.einsum("nhij,jnhd->inhd", attn, vh, precision=hp).reshape(B, N, C)
    o = jnp.einsum("bnc,dc->bnd", ctx, params["out_proj_w"], precision=hp) + params["out_proj_b"]
    y = jnp.einsum("bnc,dc->bnd", o, params["mlp_w"], precision=hp) + params["mlp_b"]
    y = ln(y, params["ln_w"], params["ln_b"])
    return jnp.transpose(y, (0, 2, 1)).reshape(B, -1, H, W)


if __name__ == "__main__":
    # Small shapes consistent with the module: in_channels=16, d_model=32, H=W=16.
    B, C, H, W = 2, 16, 16, 16
    D = 32

    key = jax.random.PRNGKey(0)
    ks = jax.random.split(key, 20)
    f32 = jnp.float32
    x = jax.random.normal(ks[0], (B, C, H, W), f32)

    params = {
        "qn_w": 1.0 + 0.1 * jax.random.normal(ks[1], (C,), f32),
        "qn_b": 0.1 * jax.random.normal(ks[2], (C,), f32),
        "kn_w": 1.0 + 0.1 * jax.random.normal(ks[3], (C,), f32),
        "kn_b": 0.1 * jax.random.normal(ks[4], (C,), f32),
        "vn_w": 1.0 + 0.1 * jax.random.normal(ks[5], (C,), f32),
        "vn_b": 0.1 * jax.random.normal(ks[6], (C,), f32),
        "in_proj_w": 0.2 * jax.random.normal(ks[7], (3 * C, C), f32),
        "in_proj_b": 0.05 * jax.random.normal(ks[8], (3 * C,), f32),
        "out_proj_w": 0.2 * jax.random.normal(ks[9], (C, C), f32),
        "out_proj_b": 0.05 * jax.random.normal(ks[10], (C,), f32),
        "mlp_w": 0.2 * jax.random.normal(ks[11], (D, C), f32),
        "mlp_b": 0.05 * jax.random.normal(ks[12], (D,), f32),
        "ln_w": 1.0 + 0.1 * jax.random.normal(ks[13], (D,), f32),
        "ln_b": 0.1 * jax.random.normal(ks[14], (D,), f32),
    }

    out = multi_head_co_attention(x, params)
    out = jax.block_until_ready(out)
    assert out.shape == (B, D, H, W), out.shape

    ref = reference_forward(x, params)
    max_err = float(jnp.max(jnp.abs(out - ref)))
    if not bool(jnp.allclose(out, ref, rtol=1e-2, atol=1e-2)):
        raise AssertionError(f"Pallas kernel mismatch vs reference, max abs err={max_err}")
    print("KERNEL_OK")
</pallas_src>

<mosaic_0001>
module attributes {stable_mosaic.version = 11 : i64} {
  func.func @coattn_kernel(%arg0: i32, %arg1: memref<2x16x128xf32, #tpu.memory_space<vmem>>, %arg2: memref<48x16xf32, #tpu.memory_space<vmem>>, %arg3: memref<48x1xf32, #tpu.memory_space<vmem>>, %arg4: memref<32x16xf32, #tpu.memory_space<vmem>>, %arg5: memref<32x3xf32, #tpu.memory_space<vmem>>, %arg6: memref<2x32x128xf32, #tpu.memory_space<vmem>>) attributes {dimension_semantics = [#tpu.dimension_semantics<parallel>], iteration_bounds = array<i64: 2>, scalar_prefetch = 0 : i64, scratch_operands = 0 : i64, tpu.core_type = #tpu.core_type<tc>, window_params = [{transform_indices = @transform_0, window_bounds = array<i64: 2, 16, 128>}, {pipeline_mode = #tpu.pipeline_mode<synchronous>, transform_indices = @transform_1, window_bounds = array<i64: 48, 16>}, {pipeline_mode = #tpu.pipeline_mode<synchronous>, transform_indices = @transform_2, window_bounds = array<i64: 48, 1>}, {pipeline_mode = #tpu.pipeline_mode<synchronous>, transform_indices = @transform_3, window_bounds = array<i64: 32, 16>}, {pipeline_mode = #tpu.pipeline_mode<synchronous>, transform_indices = @transform_4, window_bounds = array<i64: 32, 3>}, {transform_indices = @transform_5, window_bounds = array<i64: 2, 32, 128>}]} {
    %c0 = arith.constant 0 : index
    %c0_0 = arith.constant 0 : index
    %c0_1 = arith.constant 0 : index
    %0 = vector.load %arg1[%c0, %c0_0, %c0_1] : memref<2x16x128xf32, #tpu.memory_space<vmem>>, vector<2x16x128xf32>
    %cst = arith.constant dense<0.000000e+00> : vector<2x128xf32>
    %1 = vector.multi_reduction <add>, %0, %cst [1] : vector<2x16x128xf32> to vector<2x128xf32>
    %2 = vector.shape_cast %1 : vector<2x128xf32> to vector<2x1x128xf32>
    %cst_2 = arith.constant 1.600000e+01 : f32
    %3 = vector.broadcast %cst_2 : f32 to vector<2x1x128xf32>
    %4 = arith.divf %2, %3 : vector<2x1x128xf32>
    %5 = vector.broadcast %4 : vector<2x1x128xf32> to vector<2x16x128xf32>
    %6 = arith.subf %0, %5 : vector<2x16x128xf32>
    %7 = arith.mulf %6, %6 : vector<2x16x128xf32>
    %cst_3 = arith.constant dense<0.000000e+00> : vector<2x128xf32>
    %8 = vector.multi_reduction <add>, %7, %cst_3 [1] : vector<2x16x128xf32> to vector<2x128xf32>
    %9 = vector.shape_cast %8 : vector<2x128xf32> to vector<2x1x128xf32>
    %cst_4 = arith.constant 1.600000e+01 : f32
    %10 = vector.broadcast %cst_4 : f32 to vector<2x1x128xf32>
    %11 = arith.divf %9, %10 : vector<2x1x128xf32>
    %12 = vector.broadcast %4 : vector<2x1x128xf32> to vector<2x16x128xf32>
    %13 = arith.subf %0, %12 : vector<2x16x128xf32>
    %cst_5 = arith.constant 9.99999974E-6 : f32
    %14 = vector.broadcast %cst_5 : f32 to vector<2x1x128xf32>
    %15 = arith.addf %11, %14 : vector<2x1x128xf32>
    %16 = math.rsqrt %15 : vector<2x1x128xf32>
    %17 = vector.broadcast %16 : vector<2x1x128xf32> to vector<2x16x128xf32>
    %18 = arith.mulf %13, %17 : vector<2x16x128xf32>
    %19 = vector.extract_strided_slice %18 {offsets = [0, 0, 0], sizes = [1, 16, 128], strides = [1, 1, 1]} : vector<2x16x128xf32> to vector<1x16x128xf32>
    %20 = vector.shape_cast %19 : vector<1x16x128xf32> to vector<16x128xf32>
    %21 = vector.extract_strided_slice %18 {offsets = [1, 0, 0], sizes = [1, 16, 128], strides = [1, 1, 1]} : vector<2x16x128xf32> to vector<1x16x128xf32>
    %22 = vector.shape_cast %21 : vector<1x16x128xf32> to vector<16x128xf32>
    %23 = tpu.concatenate %20, %22 in 1 : vector<16x128xf32>, vector<16x128xf32> -> vector<16x256xf32>
    %c0_6 = arith.constant 0 : index
    %c0_7 = arith.constant 0 : index
    %24 = vector.load %arg2[%c0_6, %c0_7] : memref<48x16xf32, #tpu.memory_space<vmem>>, vector<48x16xf32>
    %cst_8 = arith.constant dense<0.000000e+00> : vector<48x256xf32>
    %25 = tpu.matmul %24, %23, %cst_8 {dimension_numbers = #tpu.dot_dimension_numbers<[1], [0], [0], [1], [0, 0, 1, 1], [], []>} : vector<48x16xf32>, vector<16x256xf32>, vector<48x256xf32> -> vector<48x256xf32>
    %c0_9 = arith.constant 0 : index
    %c0_10 = arith.constant 0 : index
    %26 = vector.load %arg3[%c0_9, %c0_10] : memref<48x1xf32, #tpu.memory_space<vmem>>, vector<48x1xf32>
    %27 = vector.broadcast %26 : vector<48x1xf32> to vector<48x256xf32>
    %28 = arith.addf %25, %27 : vector<48x256xf32>
    %29 = vector.extract_strided_slice %28 {offsets = [0, 0], sizes = [16, 128], strides = [1, 1]} : vector<48x256xf32> to vector<16x128xf32>
    %30 = vector.shape_cast %29 : vector<16x128xf32> to vector<4x4x128xf32>
    %31 = vector.extract_strided_slice %28 {offsets = [0, 128], sizes = [16, 128], strides = [1, 1]} : vector<48x256xf32> to vector<16x128xf32>
    %32 = vector.shape_cast %31 : vector<16x128xf32> to vector<4x4x128xf32>
    %33 = vector.extract_strided_slice %28 {offsets = [16, 0], sizes = [16, 128], strides = [1, 1]} : vector<48x256xf32> to vector<16x128xf32>
    %34 = vector.shape_cast %33 : vector<16x128xf32> to vector<4x4x128xf32>
    %35 = vector.extract_strided_slice %28 {offsets = [16, 128], sizes = [16, 128], strides = [1, 1]} : vector<48x256xf32> to vector<16x128xf32>
    %36 = vector.shape_cast %35 : vector<16x128xf32> to vector<4x4x128xf32>
    %37 = vector.extract_strided_slice %28 {offsets = [32, 0], sizes = [16, 128], strides = [1, 1]} : vector<48x256xf32> to vector<16x128xf32>
    %38 = vector.shape_cast %37 : vector<16x128xf32> to vector<4x4x128xf32>
    %39 = vector.extract_strided_slice %28 {offsets = [32, 128], sizes = [16, 128], strides = [1, 1]} : vector<48x256xf32> to vector<16x128xf32>
    %40 = vector.shape_cast %39 : vector<16x128xf32> to vector<4x4x128xf32>
    %41 = arith.mulf %30, %34 : vector<4x4x128xf32>
    %cst_11 = arith.constant dense<0.000000e+00> : vector<4x128xf32>
    %42 = vector.multi_reduction <add>, %41, %cst_11 [1] : vector<4x4x128xf32> to vector<4x128xf32>
    %43 = arith.mulf %30, %36 : vector<4x4x128xf32>
    %cst_12 = arith.constant dense<0.000000e+00> : vector<4x128xf32>
    %44 = vector.multi_reduction <add>, %43, %cst_12 [1] : vector<4x4x128xf32> to vector<4x128xf32>
    %45 = arith.maximumf %42, %44 : vector<4x128xf32>
    %46 = arith.subf %42, %45 : vector<4x128xf32>
    %47 = math.exp %46 : vector<4x128xf32>
    %48 = arith.subf %44, %45 : vector<4x128xf32>
    %49 = math.exp %48 : vector<4x128xf32>
    %50 = arith.addf %47, %49 : vector<4x128xf32>
    %51 = tpu.reciprocal %50 {approx = true} : vector<4x128xf32> -> vector<4x128xf32>
    %52 = arith.mulf %47, %51 : vector<4x128xf32>
    %53 = vector.shape_cast %52 : vector<4x128xf32> to vector<4x1x128xf32>
    %54 = vector.broadcast %53 : vector<4x1x128xf32> to vector<4x4x128xf32>
    %55 = arith.mulf %54, %38 : vector<4x4x128xf32>
    %56 = arith.mulf %49, %51 : vector<4x128xf32>
    %57 = vector.shape_cast %56 : vector<4x128xf32> to vector<4x1x128xf32>
    %58 = vector.broadcast %57 : vector<4x1x128xf32> to vector<4x4x128xf32>
    %59 = arith.mulf %58, %40 : vector<4x4x128xf32>
    %60 = arith.addf %55, %59 : vector<4x4x128xf32>
    %61 = vector.shape_cast %60 : vector<4x4x128xf32> to vector<16x128xf32>
    %62 = arith.mulf %32, %34 : vector<4x4x128xf32>
    %cst_13 = arith.constant dense<0.000000e+00> : vector<4x128xf32>
    %63 = vector.multi_reduction <add>, %62, %cst_13 [1] : vector<4x4x128xf32> to vector<4x128xf32>
    %64 = arith.mulf %32, %36 : vector<4x4x128xf32>
    %cst_14 = arith.constant dense<0.000000e+00> : vector<4x128xf32>
    %65 = vector.multi_reduction <add>, %64, %cst_14 [1] : vector<4x4x128xf32> to vector<4x128xf32>
    %66 = arith.maximumf %63, %65 : vector<4x128xf32>
    %67 = arith.subf %63, %66 : vector<4x128xf32>
    %68 = math.exp %67 : vector<4x128xf32>
    %69 = arith.subf %65, %66 : vector<4x128xf32>
    %70 = math.exp %69 : vector<4x128xf32>
    %71 = arith.addf %68, %70 : vector<4x128xf32>
    %72 = tpu.reciprocal %71 {approx = true} : vector<4x128xf32> -> vector<4x128xf32>
    %73 = arith.mulf %68, %72 : vector<4x128xf32>
    %74 = vector.shape_cast %73 : vector<4x128xf32> to vector<4x1x128xf32>
    %75 = vector.broadcast %74 : vector<4x1x128xf32> to vector<4x4x128xf32>
    %76 = arith.mulf %75, %38 : vector<4x4x128xf32>
    %77 = arith.mulf %70, %72 : vector<4x128xf32>
    %78 = vector.shape_cast %77 : vector<4x128xf32> to vector<4x1x128xf32>
    %79 = vector.broadcast %78 : vector<4x1x128xf32> to vector<4x4x128xf32>
    %80 = arith.mulf %79, %40 : vector<4x4x128xf32>
    %81 = arith.addf %76, %80 : vector<4x4x128xf32>
    %82 = vector.shape_cast %81 : vector<4x4x128xf32> to vector<16x128xf32>
    %83 = tpu.concatenate %61, %82 in 1 : vector<16x128xf32>, vector<16x128xf32> -> vector<16x256xf32>
    %c0_15 = arith.constant 0 : index
    %c0_16 = arith.constant 0 : index
    %84 = vector.load %arg5[%c0_15, %c0_16] : memref<32x3xf32, #tpu.memory_space<vmem>>, vector<32x1xf32>
    %c0_17 = arith.constant 0 : index
    %c1 = arith.constant 1 : index
    %85 = vector.load %arg5[%c0_17, %c1] : memref<32x3xf32, #tpu.memory_space<vmem>>, vector<32x1xf32>
    %c0_18 = arith.constant 0 : index
    %c2 = arith.constant 2 : index
    %86 = vector.load %arg5[%c0_18, %c2] : memref<32x3xf32, #tpu.memory_space<vmem>>, vector<32x1xf32>
    %c0_19 = arith.constant 0 : index
    %c0_20 = arith.constant 0 : index
    %87 = vector.load %arg4[%c0_19, %c0_20] : memref<32x16xf32, #tpu.memory_space<vmem>>, vector<32x16xf32>
    %cst_21 = arith.constant dense<0.000000e+00> : vector<32x256xf32>
    %88 = tpu.matmul %87, %83, %cst_21 {dimension_numbers = #tpu.dot_dimension_numbers<[1], [0], [0], [1], [0, 0, 1, 1], [], []>} : vector<32x16xf32>, vector<16x256xf32>, vector<32x256xf32> -> vector<32x256xf32>
    %89 = vector.broadcast %84 : vector<32x1xf32> to vector<32x256xf32>
    %90 = arith.addf %88, %89 : vector<32x256xf32>
    %cst_22 = arith.constant dense<0.000000e+00> : vector<256xf32>
    %91 = vector.multi_reduction <add>, %90, %cst_22 [0] : vector<32x256xf32> to vector<256xf32>
    %92 = vector.shape_cast %91 : vector<256xf32> to vector<1x256xf32>
    %cst_23 = arith.constant 3.200000e+01 : f32
    %93 = vector.broadcast %cst_23 : f32 to vector<1x256xf32>
    %94 = arith.divf %92, %93 : vector<1x256xf32>
    %95 = vector.broadcast %94 : vector<1x256xf32> to vector<32x256xf32>
    %96 = arith.subf %90, %95 : vector<32x256xf32>
    %97 = arith.mulf %96, %96 : vector<32x256xf32>
    %cst_24 = arith.constant dense<0.000000e+00> : vector<256xf32>
    %98 = vector.multi_reduction <add>, %97, %cst_24 [0] : vector<32x256xf32> to vector<256xf32>
    %99 = vector.shape_cast %98 : vector<256xf32> to vector<1x256xf32>
    %cst_25 = arith.constant 3.200000e+01 : f32
    %100 = vector.broadcast %cst_25 : f32 to vector<1x256xf32>
    %101 = arith.divf %99, %100 : vector<1x256xf32>
    %102 = vector.broadcast %94 : vector<1x256xf32> to vector<32x256xf32>
    %103 = arith.subf %90, %102 : vector<32x256xf32>
    %cst_26 = arith.constant 9.99999974E-6 : f32
    %104 = vector.broadcast %cst_26 : f32 to vector<1x256xf32>
    %105 = arith.addf %101, %104 : vector<1x256xf32>
    %106 = math.rsqrt %105 : vector<1x256xf32>
    %107 = vector.broadcast %106 : vector<1x256xf32> to vector<32x256xf32>
    %108 = arith.mulf %103, %107 : vector<32x256xf32>
    %109 = vector.broadcast %85 : vector<32x1xf32> to vector<32x256xf32>
    %110 = arith.mulf %108, %109 : vector<32x256xf32>
    %111 = vector.broadcast %86 : vector<32x1xf32> to vector<32x256xf32>
    %112 = arith.addf %110, %111 : vector<32x256xf32>
    %113 = vector.extract_strided_slice %112 {offsets = [0, 0], sizes = [32, 128], strides = [1, 1]} : vector<32x256xf32> to vector<32x128xf32>
    %c0_27 = arith.constant 0 : index
    %c0_28 = arith.constant 0 : index
    %c0_29 = arith.constant 0 : index
    %114 = vector.load %arg6[%c0_27, %c0_28, %c0_29] : memref<2x32x128xf32, #tpu.memory_space<vmem>>, vector<1x32x128xf32>
    %115 = vector.shape_cast %114 : vector<1x32x128xf32> to vector<32x128xf32>
    %116 = vector.shape_cast %113 : vector<32x128xf32> to vector<1x32x128xf32>
    tpu.vector_store %arg6[%c0_27, %c0_28, %c0_29], %116 {strides = array<i32>} : memref<2x32x128xf32, #tpu.memory_space<vmem>>, vector<1x32x128xf32>,
    %117 = vector.extract_strided_slice %112 {offsets = [0, 128], sizes = [32, 128], strides = [1, 1]} : vector<32x256xf32> to vector<32x128xf32>
    %c1_30 = arith.constant 1 : index
    %c0_31 = arith.constant 0 : index
    %c0_32 = arith.constant 0 : index
    %118 = vector.load %arg6[%c1_30, %c0_31, %c0_32] : memref<2x32x128xf32, #tpu.memory_space<vmem>>, vector<1x32x128xf32>
    %119 = vector.shape_cast %118 : vector<1x32x128xf32> to vector<32x128xf32>
    %120 = vector.shape_cast %117 : vector<32x128xf32> to vector<1x32x128xf32>
    tpu.vector_store %arg6[%c1_30, %c0_31, %c0_32], %120 {strides = array<i32>} : memref<2x32x128xf32, #tpu.memory_space<vmem>>, vector<1x32x128xf32>,
    return
  }
  func.func @transform_0(%arg0: i32) -> (i32, i32, i32) {
    %c0_i32 = arith.constant 0 : i32
    %c0_i32_0 = arith.constant 0 : i32
    %c0_i32_1 = arith.constant 0 : i32
    return %c0_i32, %c0_i32_0, %arg0 : i32, i32, i32
  }
  func.func @transform_1(%arg0: i32) -> (i32, i32) {
    %c0_i32 = arith.constant 0 : i32
    %c0_i32_0 = arith.constant 0 : i32
    %c0_i32_1 = arith.constant 0 : i32
    return %c0_i32, %c0_i32_0 : i32, i32
  }
  func.func @transform_2(%arg0: i32) -> (i32, i32) {
    %c0_i32 = arith.constant 0 : i32
    %c0_i32_0 = arith.constant 0 : i32
    %c0_i32_1 = arith.constant 0 : i32
    return %c0_i32, %c0_i32_0 : i32, i32
  }
  func.func @transform_3(%arg0: i32) -> (i32, i32) {
    %c0_i32 = arith.constant 0 : i32
    %c0_i32_0 = arith.constant 0 : i32
    %c0_i32_1 = arith.constant 0 : i32
    return %c0_i32, %c0_i32_0 : i32, i32
  }
  func.func @transform_4(%arg0: i32) -> (i32, i32) {
    %c0_i32 = arith.constant 0 : i32
    %c0_i32_0 = arith.constant 0 : i32
    %c0_i32_1 = arith.constant 0 : i32
    return %c0_i32, %c0_i32_0 : i32, i32
  }
  func.func @transform_5(%arg0: i32) -> (i32, i32, i32) {
    %c0_i32 = arith.constant 0 : i32
    %c0_i32_0 = arith.constant 0 : i32
    %c0_i32_1 = arith.constant 0 : i32
    return %c0_i32, %c0_i32_0, %arg0 : i32, i32, i32
  }
}

</mosaic_0001>

<llo_original>
// kernel: tpu_custom_call.1
$region0: #{tpu_custom_call.1}
  #allocation0 [shape = 'u32[]', space=smem, size = 0x4, offset = 0x4, fixed_abs, tag = 'smem constant byte address 0x4 - core index']
  #allocation1 [shape = 'u32[72,128]{1,0:T(1,128)}', space=vmem, size = 0x9000, scoped, tag = 'internal scratch']
  %s0 = inlined_call_operand.vmem [shape: f32[2,16,256], index: 0, kind: input, shape index: {}]
  %s1 = inlined_call_operand.vmem [shape: f32[48,16], index: 1, kind: input, shape index: {}]
  %s2 = inlined_call_operand.vmem [shape: f32[48,1], index: 2, kind: input, shape index: {}]
  %s3 = inlined_call_operand.vmem [shape: f32[32,16], index: 3, kind: input, shape index: {}]
  %s4 = inlined_call_operand.vmem [shape: f32[32,3], index: 4, kind: input, shape index: {}]
  %s5 = inlined_call_operand.hbm [shape: f32[2,32,256], index: 5, kind: output, shape index: {}]
  %s6 = sld [smem:[#allocation0]]
  $region91: #{tpu_custom_call.1} parent=0
    _
  %s8 = ssub.s32 1, %s6
  %s9 = scalar_select 0, %s8, %s6
  $region1: #{tpu_custom_call.1} parent=0
    #allocation2 [shape = 'u8[32768]{0}', space=vmem, size = 0x8000, scoped, tag = 'input window, operand 0']
    #allocation3 [shape = 'u8[65536]{0}', space=vmem, size = 0x10000, scoped, tag = 'output window, operand 0']
    #allocation4 [shape = 's32[2]{0}', space=sflag, size = 0x8, scoped, tag = 'scoped memory for tpu_custom_call.1']
    %10 = vsyncpa [#allocation4], 0
    %s11 = scalar_lea.sflag [#allocation4], 1
    %12 = vsyncpa %s11, 0
    loop: start=0, step=1, limit=4
    $region2: #{tpu_custom_call.1} parent=1 // loop_pre_header
      _
    $region3: #{tpu_custom_call.1} parent=1 // loop_header
      %s14 = sphi 0, %s18
      %p15 = scmp.ge.s32.totalorder %s14, 4
      %s24 = sphi 0, %s26
      %s27 = sphi 0, %s24
      %s28 = sphi 0, %s27
      %s44 = sphi 0, %s28
      %s48 = sphi 0, %s48
      %s50 = sphi 0, %s48
      %s51 = sphi 0, %s50
      %s65 = sphi 0, %s51
      %s69 = sphi 0, %s69
      %s71 = sphi 0, %s69
      %s72 = sphi 0, %s71
      %s86 = sphi 0, %s72
      %s90 = sphi 0, %s90
      %s92 = sphi 0, %s90
      %s93 = sphi 0, %s92
      %s107 = sphi 0, %s93
      %s111 = sphi 0, %s111
      %s113 = sphi 0, %s111
      %s114 = sphi 0, %s113
      %s128 = sphi 0, %s114
      %s134 = sphi 0, %s136
      %s137 = sphi 0, %s134
      %s138 = sphi 0, %s137
      %s154 = sphi 0, %s138
    $region4: #{tpu_custom_call.1} parent=1 // loop_header_branch
      %17 = sbr.rel (%p15) target = $region8
    $region5: #{tpu_custom_call.1} parent=1 // loop_body
      %s19 = ssub.s32 %s14, 1
      %s20 = ssub.s32 %s14, 2
      %s21 = sadd.s32 %s14, 1
      %s22 = ssub.s32 %s14, %s21
      %p23 = scmp.eq.s32.totalorder %s22, 0
      %s25 = sadd.s32 %s24, 1
      %s26 = scalar_select %p23, %s24, %s25
      %p29 = pneg %p23
      %p30 = scmp.eq.s32.totalorder %s14, 1
      %p31 = por %p29, %p30
      %p32 = scmp.ne.s32.totalorder %s24, %s27
      %p33 = scmp.eq.s32.totalorder %s14, 0
      %p34 = por %p32, %p33
      %p35 = scmp.ne.s32.totalorder %s24, %s27
      %p36 = scmp.eq.s32.totalorder %s19, 1
      %p37 = por %p35, %p36
      %p38 = scmp.ne.s32.totalorder %s27, %s28
      %p39 = scmp.eq.s32.totalorder %s19, 0
      %p40 = por %p38, %p39
      %p41 = scmp.ne.s32.totalorder %s27, %s28
      %p42 = scmp.eq.s32.totalorder %s20, 1
      %p43 = por %p41, %p42
      %p45 = scmp.ne.s32.totalorder %s28, %s44
      %p46 = scmp.eq.s32.totalorder %s20, 0
      %p47 = por %p45, %p46
      %s49 = sadd.s32 %s48, 1
      %p52 = scmp.eq.s32.totalorder %s14, 1
      %p53 = scmp.ne.s32.totalorder %s48, %s50
      %p54 = scmp.eq.s32.totalorder %s14, 0
      %p55 = por %p53, %p54
      %p56 = scmp.ne.s32.totalorder %s48, %s50
      %p57 = scmp.eq.s32.totalorder %s19, 1
      %p58 = por %p56, %p57
      %p59 = scmp.ne.s32.totalorder %s50, %s51
      %p60 = scmp.eq.s32.totalorder %s19, 0
      %p61 = por %p59, %p60
      %p62 = scmp.ne.s32.totalorder %s50, %s51
      %p63 = scmp.eq.s32.totalorder %s20, 1
      %p64 = por %p62, %p63
      %p66 = scmp.ne.s32.totalorder %s51, %s65
      %p67 = scmp.eq.s32.totalorder %s20, 0
      %p68 = por %p66, %p67
      %s70 = sadd.s32 %s69, 1
      %p73 = scmp.eq.s32.totalorder %s14, 1
      %p74 = scmp.ne.s32.totalorder %s69, %s71
      %p75 = scmp.eq.s32.totalorder %s14, 0
      %p76 = por %p74, %p75
      %p77 = scmp.ne.s32.totalorder %s69, %s71
      %p78 = scmp.eq.s32.totalorder %s19, 1
      %p79 = por %p77, %p78
      %p80 = scmp.ne.s32.totalorder %s71, %s72
      %p81 = scmp.eq.s32.totalorder %s19, 0
      %p82 = por %p80, %p81
      %p83 = scmp.ne.s32.totalorder %s71, %s72
      %p84 = scmp.eq.s32.totalorder %s20, 1
      %p85 = por %p83, %p84
      %p87 = scmp.ne.s32.totalorder %s72, %s86
      %p88 = scmp.eq.s32.totalorder %s20, 0
      %p89 = por %p87, %p88
      %s91 = sadd.s32 %s90, 1
      %p94 = scmp.eq.s32.totalorder %s14, 1
      %p95 = scmp.ne.s32.totalorder %s90, %s92
      %p96 = scmp.eq.s32.totalorder %s14, 0
      %p97 = por %p95, %p96
      %p98 = scmp.ne.s32.totalorder %s90, %s92
      %p99 = scmp.eq.s32.totalorder %s19, 1
      %p100 = por %p98, %p99
      %p101 = scmp.ne.s32.totalorder %s92, %s93
      %p102 = scmp.eq.s32.totalorder %s19, 0
      %p103 = por %p101, %p102
      %p104 = scmp.ne.s32.totalorder %s92, %s93
      %p105 = scmp.eq.s32.totalorder %s20, 1
      %p106 = por %p104, %p105
      %p108 = scmp.ne.s32.totalorder %s93, %s107
      %p109 = scmp.eq.s32.totalorder %s20, 0
      %p110 = por %p108, %p109
      %s112 = sadd.s32 %s111, 1
      %p115 = scmp.eq.s32.totalorder %s14, 1
      %p116 = scmp.ne.s32.totalorder %s111, %s113
      %p117 = scmp.eq.s32.totalorder %s14, 0
      %p118 = por %p116, %p117
      %p119 = scmp.ne.s32.totalorder %s111, %s113
      %p120 = scmp.eq.s32.totalorder %s19, 1
      %p121 = por %p119, %p120
      %p122 = scmp.ne.s32.totalorder %s113, %s114
      %p123 = scmp.eq.s32.totalorder %s19, 0
      %p124 = por %p122, %p123
      %p125 = scmp.ne.s32.totalorder %s113, %s114
      %p126 = scmp.eq.s32.totalorder %s20, 1
      %p127 = por %p125, %p126
      %p129 = scmp.ne.s32.totalorder %s114, %s128
      %p130 = scmp.eq.s32.totalorder %s20, 0
      %p131 = por %p129, %p130
      %s132 = ssub.s32 %s14, %s21
      %p133 = scmp.eq.s32.totalorder %s132, 0
      %s135 = sadd.s32 %s134, 1
      %s136 = scalar_select %p133, %s134, %s135
      %p139 = pneg %p133
      %p140 = scmp.eq.s32.totalorder %s14, 1
      %p141 = por %p139, %p140
      %p142 = scmp.ne.s32.totalorder %s134, %s137
      %p143 = scmp.eq.s32.totalorder %s14, 0
      %p144 = por %p142, %p143
      %p145 = scmp.ne.s32.totalorder %s134, %s137
      %p146 = scmp.eq.s32.totalorder %s19, 1
      %p147 = por %p145, %p146
      %p148 = scmp.ne.s32.totalorder %s137, %s138
      %p149 = scmp.eq.s32.totalorder %s19, 0
      %p150 = por %p148, %p149
      %p151 = scmp.ne.s32.totalorder %s137, %s138
      %p152 = scmp.eq.s32.totalorder %s20, 1
      %p153 = por %p151, %p152
      %p155 = scmp.ne.s32.totalorder %s138, %s154
      %p156 = scmp.eq.s32.totalorder %s20, 0
      %p157 = por %p155, %p156
      %p158 = scmp.le.s32.totalorder 1, %s14
      %p159 = scmp.lt.s32.totalorder %s14, 3
      %p160 = pnand %p158, %p159
      %p161 = pneg %p160
      // Predicated region
      $region9: #{tpu_custom_call.1} parent=5 // pred_check
        _
      $region10: #{tpu_custom_call.1} parent=5 // pred_check_branch
        %163 = sbr.rel (%p160) target = $region12
      $region11: #{tpu_custom_call.1} parent=5 // pred_region
        %s164 = ssub.s32 %s14, 1
        // Predicated region
        $region13: #{tpu_custom_call.1} parent=11 // pred_check
          %p165 = pneg %p61
        $region14: #{tpu_custom_call.1} parent=11 // pred_check_branch
          %167 = sbr.rel (%p165) target = $region16
        $region15: #{tpu_custom_call.1} parent=11 // pred_region
          _
        $region16: #{tpu_custom_call.1} parent=11 // pred_fallthru
          _
        // Predicated region
        $region17: #{tpu_custom_call.1} parent=11 // pred_check
          %p168 = pneg %p82
        $region18: #{tpu_custom_call.1} parent=11 // pred_check_branch
          %170 = sbr.rel (%p168) target = $region20
        $region19: #{tpu_custom_call.1} parent=11 // pred_region
          _
        $region20: #{tpu_custom_call.1} parent=11 // pred_fallthru
          _
        // Predicated region
        $region21: #{tpu_custom_call.1} parent=11 // pred_check
          %p171 = pneg %p103
        $region22: #{tpu_custom_call.1} parent=11 // pred_check_branch
          %173 = sbr.rel (%p171) target = $region24
        $region23: #{tpu_custom_call.1} parent=11 // pred_region
          _
        $region24: #{tpu_custom_call.1} parent=11 // pred_fallthru
          _
        // Predicated region
        $region25: #{tpu_custom_call.1} parent=11 // pred_check
          %p174 = pneg %p124
        $region26: #{tpu_custom_call.1} parent=11 // pred_check_branch
          %176 = sbr.rel (%p174) target = $region28
        $region27: #{tpu_custom_call.1} parent=11 // pred_region
          _
        $region28: #{tpu_custom_call.1} parent=11 // pred_fallthru
          _
      $region12: #{tpu_custom_call.1} parent=5 // pred_fallthru
        _
      %p177 = scmp.lt.s32.totalorder %s14, 2
      // Predicated region
      $region29: #{tpu_custom_call.1} parent=5 // pred_check
        %p178 = pneg %p177
      $region30: #{tpu_custom_call.1} parent=5 // pred_check_branch
        %180 = sbr.rel (%p178) target = $region32
      $region31: #{tpu_custom_call.1} parent=5 // pred_region
        // Predicated region
        $region33: #{tpu_custom_call.1} parent=31 // pred_check
          %p181 = pneg %p34
        $region34: #{tpu_custom_call.1} parent=31 // pred_check_branch
          %183 = sbr.rel (%p181) target = $region36
        $region35: #{tpu_custom_call.1} parent=31 // pred_region
          %s184 = sand.u32 %s24, 1
          %s185 = sand.u32 %s24, 1
          %s186 = smul.addr %s185, 32
          %s187 = scalar_lea.vmem [#allocation2], %s186
          %s188 = smul.addr %s14, 8
          %s189 = scalar_lea.vmem %s0, %s188
          // Predicated region
          $region37: #{tpu_custom_call.1} parent=35 // pred_check
            _
          $region38: #{tpu_custom_call.1} parent=35 // pred_check_branch
            %191 = sbr.rel (0) target = $region40
          $region39: #{tpu_custom_call.1} parent=35 // pred_region
            // Predicated region
            $region41: #{tpu_custom_call.1} parent=39 // pred_check
              _
            $region42: #{tpu_custom_call.1} parent=39 // pred_check_branch
              %193 = sbr.rel (0) target = $region44
            $region43: #{tpu_custom_call.1} parent=39 // pred_region
              // Predicated region
              $region56: #{tpu_custom_call.1} parent=43 // pred_check
                _
              $region57: #{tpu_custom_call.1} parent=43 // pred_check_branch
                %215 = sbr.rel (0) target = $region59
              $region58: #{tpu_custom_call.1} parent=43 // pred_region
                loop: start=0, step=1, limit=1
                $region60: #{tpu_custom_call.1} parent=58 // loop_pre_header
                  _
                $region61: #{tpu_custom_call.1} parent=58 // loop_header
                  %s217 = sphi 0, %s221
                  %p218 = scmp.ge.s32.totalorder %s217, 1
                  %s222 = sphi %s189, %s189
                  %s223 = sphi %s187, %s187
                $region62: #{tpu_custom_call.1} parent=58 // loop_header_branch
                  %220 = sbr.rel (%p218) target = $region66
                $region63: #{tpu_custom_call.1} parent=58 // loop_body
                  %v224 = vld [vmem:[%s222] sm:$0xff]
                  %225 = vst [vmem:[%s223] sm:$0xff] %v224
                  %v226 = vld [vmem:[%s222 + $0x10] sm:$0xff]
                  %227 = vst [vmem:[%s223 + $0x8] sm:$0xff] %v226
                  %v228 = vld [vmem:[%s222 + $0x20] sm:$0xff]
                  %229 = vst [vmem:[%s223 + $0x10] sm:$0xff] %v228
                  %v230 = vld [vmem:[%s222 + $0x30] sm:$0xff]
                  %231 = vst [vmem:[%s223 + $0x18] sm:$0xff] %v230
                $region64: #{tpu_custom_call.1} parent=58 // loop_footer
                  %s221 = sadd.s32 1, %s217
                $region65: #{tpu_custom_call.1} parent=58 // loop_footer_branch
                  %216 = sbr.rel target = $region61
                $region66: #{tpu_custom_call.1} parent=58 // loop_exit
                  _
              $region59: #{tpu_custom_call.1} parent=43 // pred_fallthru
                _
              // Predicated region
              $region67: #{tpu_custom_call.1} parent=43 // pred_check
                _
              $region68: #{tpu_custom_call.1} parent=43 // pred_check_branch
                %233 = sbr.rel target = $region70
              $region69: #{tpu_custom_call.1} parent=43 // pred_region
                _
              $region70: #{tpu_custom_call.1} parent=43 // pred_fallthru
                _
            $region44: #{tpu_custom_call.1} parent=39 // pred_fallthru
              _
            // Predicated region
            $region45: #{tpu_custom_call.1} parent=39 // pred_check
              _
            $region46: #{tpu_custom_call.1} parent=39 // pred_check_branch
              %195 = sbr.rel target = $region48
            $region47: #{tpu_custom_call.1} parent=39 // pred_region
              %s197 = ssub.s32 256, 1
              loop: start=0, step=1, limit=1
              $region49: #{tpu_custom_call.1} parent=47 // loop_pre_header
                _
              $region50: #{tpu_custom_call.1} parent=47 // loop_header
                %s199 = sphi 0, %s203
                %p200 = scmp.ge.s32.totalorder %s199, 1
                %s204 = sphi %s189, %s189
                %s205 = sphi %s187, %s187
              $region51: #{tpu_custom_call.1} parent=47 // loop_header_branch
                %202 = sbr.rel (%p200) target = $region55
              $region52: #{tpu_custom_call.1} parent=47 // loop_body
                %v206 = vld [vmem:[%s204] sm:%s197]
                %207 = vst [vmem:[%s205] sm:%s197] %v206
                %v208 = vld [vmem:[%s204 + $0x10] sm:%s197]
                %209 = vst [vmem:[%s205 + $0x8] sm:%s197] %v208
                %v210 = vld [vmem:[%s204 + $0x20] sm:%s197]
                %211 = vst [vmem:[%s205 + $0x10] sm:%s197] %v210
                %v212 = vld [vmem:[%s204 + $0x30] sm:%s197]
                %213 = vst [vmem:[%s205 + $0x18] sm:%s197] %v212
              $region53: #{tpu_custom_call.1} parent=47 // loop_footer
                %s203 = sadd.s32 1, %s199
              $region54: #{tpu_custom_call.1} parent=47 // loop_footer_branch
                %198 = sbr.rel target = $region50
              $region55: #{tpu_custom_call.1} parent=47 // loop_exit
                _
            $region48: #{tpu_custom_call.1} parent=39 // pred_fallthru
              _
          $region40: #{tpu_custom_call.1} parent=35 // pred_fallthru
            _
          %234 = vnop
        $region36: #{tpu_custom_call.1} parent=31 // pred_fallthru
          _
      $region32: #{tpu_custom_call.1} parent=5 // pred_fallthru
        _
      %p235 = scmp.le.s32.totalorder 1, %s14
      %p236 = scmp.lt.s32.totalorder %s14, 3
      %p237 = pnand %p235, %p236
      %p238 = pneg %p237
      // Predicated region
      $region71: #{tpu_custom_call.1} parent=5 // pred_check
        _
      $region72: #{tpu_custom_call.1} parent=5 // pred_check_branch
        %240 = sbr.rel (%p237) target = $region74
      $region73: #{tpu_custom_call.1} parent=5 // pred_region
        %s241 = ssub.s32 %s14, 1
        %s242 = sand.u32 %s27, 1
        %s243 = sand.u32 %s27, 1
        %s244 = smul.addr %s243, 32
        %s245 = scalar_lea.vmem [#allocation2], %s244
        // Predicated region
        $region75: #{tpu_custom_call.1} parent=73 // pred_check
          %p246 = pneg %p40
        $region76: #{tpu_custom_call.1} parent=73 // pred_check_branch
          %248 = sbr.rel (%p246) target = $region78
        $region77: #{tpu_custom_call.1} parent=73 // pred_region
          _
        $region78: #{tpu_custom_call.1} parent=73 // pred_fallthru
          _
        %s249 = sand.u32 %s27, 1
        %s250 = sand.u32 %s27, 1
        %s251 = smul.addr %s250, 32
        %s252 = scalar_lea.vmem [#allocation2], %s251
        %p253 = pneg %p40
        %p254 = pneg %p37
        %p255 = pneg %p61
        %p256 = pneg %p58
        %p257 = pneg %p82
        %p258 = pneg %p79
        %p259 = pneg %p103
        %p260 = pneg %p100
        %p261 = pneg %p124
        %p262 = pneg %p121
        %p263 = pneg %p150
        %p264 = pneg %p147
        %s265 = sand.u32 %s137, 1
        %s266 = scalar_lea.sflag [#allocation4], %s265
        %s267 = sand.u32 %s137, 1
        %s268 = smul.addr %s267, 64
        %s269 = scalar_lea.vmem [#allocation3], %s268
        %v270 = vld [vmem:[%s245] sm:$0xff]
        %v271 = vld [vmem:[%s245 + $0x8] sm:$0xff]
        %v272 = vld [vmem:[%s245 + $0x10] sm:$0xff]
        %v273 = vld [vmem:[%s245 + $0x18] sm:$0xff]
        %v274 = vadd.f32 %v270, %v271
        %v275 = vrot.slane %v274, 4
        %v276 = vadd.f32 %v274, %v275
        %v277 = vrot.slane %v276, 2
        %v278 = vadd.f32 %v276, %v277
        %v279 = vrot.slane %v278, 1
        %v280 = vadd.f32 %v278, %v279
        %v281 = vadd.f32 %v272, %v273
        %v282 = vrot.slane %v281, 4
        %v283 = vadd.f32 %v281, %v282
        %v284 = vrot.slane %v283, 2
        %v285 = vadd.f32 %v283, %v284
        %v286 = vrot.slane %v285, 1
        %v287 = vadd.f32 %v285, %v286
        %v288 = vrcp.pop 16.0
        %v289 = vmul.f32 16.0, %v288
        %v290 = vsub.f32 1.0, %v289
        %v291 = vmul.f32 %v288, %v290
        %v292 = vadd.f32 %v288, %v291
        %vm293 = vweird.f32 %v288
        %v294 = vsel %vm293, %v288, %v292
        %v295 = vmul.f32 %v280, %v294
        %v296 = vmul.f32 %v287, %v294
        %v297 = vsub.f32 %v270, %v295
        %v298 = vsub.f32 %v271, %v295
        %v299 = vsub.f32 %v272, %v296
        %v300 = vsub.f32 %v273, %v296
        %v301 = vmul.f32 %v297, %v297
        %v302 = vmul.f32 %v298, %v298
        %v303 = vmul.f32 %v299, %v299
        %v304 = vmul.f32 %v300, %v300
        %v305 = vadd.f32 %v301, %v302
        %v306 = vrot.slane %v305, 4
        %v307 = vadd.f32 %v305, %v306
        %v308 = vrot.slane %v307, 2
        %v309 = vadd.f32 %v307, %v308
        %v310 = vrot.slane %v309, 1
        %v311 = vadd.f32 %v309, %v310
        %v312 = vadd.f32 %v303, %v304
        %v313 = vrot.slane %v312, 4
        %v314 = vadd.f32 %v312, %v313
        %v315 = vrot.slane %v314, 2
        %v316 = vadd.f32 %v314, %v315
        %v317 = vrot.slane %v316, 1
        %v318 = vadd.f32 %v316, %v317
        %v319 = vmul.f32 %v311, %v294
        %v320 = vmul.f32 %v318, %v294
        %v321 = vadd.f32 %v319, 1e-05
        %v322 = vadd.f32 %v320, 1e-05
        %v323 = vrsqrt.pop %v321
        %v324 = vmul.f32 %v323, %v321
        %v325 = vmul.f32 %v324, %v323
        %v326 = vmul.f32 0.5, %v325
        %v327 = vsub.f32 1.5, %v326
        %v328 = vmul.f32 %v323, %v327
        %vm329 = vweird.f32 %v321
        %vm330 = vweird.f32 %v323
        %vm331 = vmor %vm329, %vm330
        %v332 = vsel %vm331, %v323, %v328
        %v333 = vrsqrt.pop %v322
        %v334 = vmul.f32 %v333, %v322
        %v335 = vmul.f32 %v334, %v333
        %v336 = vmul.f32 0.5, %v335
        %v337 = vsub.f32 1.5, %v336
        %v338 = vmul.f32 %v333, %v337
        %vm339 = vweird.f32 %v322
        %vm340 = vweird.f32 %v333
        %vm341 = vmor %vm339, %vm340
        %v342 = vsel %vm341, %v333, %v338
        %v343 = vmul.f32 %v297, %v332
        %v344 = vmul.f32 %v298, %v332
        %v345 = vmul.f32 %v299, %v342
        %v346 = vmul.f32 %v300, %v342
        %v347 = vld [vmem:[%s1] sm:$0xff]
        %v348 = vld [vmem:[%s1 + $0x8] sm:$0xff]
        %v349 = vld [vmem:[%s1 + $0x10] sm:$0xff]
        %v350 = vld [vmem:[%s1 + $0x18] sm:$0xff]
        %v351 = vld [vmem:[%s1 + $0x20] sm:$0xff]
        %v352 = vld [vmem:[%s1 + $0x28] sm:$0xff]
        %v353 = vld [vmem:[%s2] sm:$0xff]
        %v354 = vld [vmem:[%s2 + $0x8] sm:$0xff]
        %v355 = vld [vmem:[%s2 + $0x10] sm:$0xff]
        %v356 = vld [vmem:[%s2 + $0x18] sm:$0xff]
        %v357 = vld [vmem:[%s2 + $0x20] sm:$0xff]
        %v358 = vld [vmem:[%s2 + $0x28] sm:$0xff]
        %360 = vset.pattern.permute.xlu0 0
        %361 = vperm.xlu0 %360, %v353
        %v362 = vpop.permute.xlu0 %361
        %365 = vset.pattern.permute.xlu0 0
        %366 = vperm.xlu0 %365, %v354
        %v367 = vpop.permute.xlu0 %366
        %370 = vset.pattern.permute.xlu0 0
        %371 = vperm.xlu0 %370, %v355
        %v372 = vpop.permute.xlu0 %371
        %375 = vset.pattern.permute.xlu0 0
        %376 = vperm.xlu0 %375, %v356
        %v377 = vpop.permute.xlu0 %376
        %380 = vset.pattern.permute.xlu0 0
        %381 = vperm.xlu0 %380, %v357
        %v382 = vpop.permute.xlu0 %381
        %385 = vset.pattern.permute.xlu0 0
        %386 = vperm.xlu0 %385, %v358
        %v387 = vpop.permute.xlu0 %386
        %vm389 = vcmask 130048
        %v391 = vsel %vm389, %v347, 0
        %v394 = vsel %vm389, %v348, 0
        %v397 = vsel %vm389, %v349, 0
        %v400 = vsel %vm389, %v350, 0
        %v403 = vsel %vm389, %v351, 0
        %v406 = vsel %vm389, %v352, 0
        %408 = vmatpush.msra.mxu0 0.0
        %409 = vmatpush.msra.mxu0 0.0
        %410 = vmatpush.msra.mxu0 0.0
        %411 = vmatpush.msra.mxu0 0.0
        %412 = vmatpush.msra.mxu0 0.0
        %413 = vmatpush.msra.mxu0 0.0
        %414 = vmatpush.msra.mxu0 0.0
        %415 = vmatpush.msra.mxu0 0.0
        %416 = vmatpush.msra.mxu0 0.0
        %417 = vmatpush.msra.mxu0 0.0
        %418 = vmatpush.msra.mxu0 0.0
        %419 = vmatpush.msra.mxu0 0.0
        %420 = vmatpush.msra.mxu0 0.0
        %421 = vmatpush.msra.mxu0 0.0
        %422 = vmatpush.msra.mxu0 %v344
        %423 = vmatpush.msra.mxu0 %v343
        %424 = vmatmul.f32.gmra.mxu0 %v391
        %v425 = vpop.f32.mrf.mxu0
        %v426 = vadd.f32 %v362, %v425
        %427 = vmatmul.f32.gmra.mxu0 %v394
        %v428 = vpop.f32.mrf.mxu0
        %v429 = vadd.f32 %v367, %v428
        %430 = vmatmul.f32.gmra.mxu0 %v397
        %v431 = vpop.f32.mrf.mxu0
        %v432 = vadd.f32 %v372, %v431
        %433 = vmatmul.f32.gmra.mxu0 %v400
        %v434 = vpop.f32.mrf.mxu0
        %v435 = vadd.f32 %v377, %v434
        %436 = vmatmul.f32.gmra.mxu0 %v403
        %v437 = vpop.f32.mrf.mxu0
        %v438 = vadd.f32 %v382, %v437
        %439 = vmatmul.f32.gmra.mxu0 %v406
        %v440 = vpop.f32.mrf.mxu0
        %v441 = vadd.f32 %v387, %v440
        %442 = vdwg.mxu0
        %443 = vmatpush.msra.mxu0 0.0
        %444 = vmatpush.msra.mxu0 0.0
        %445 = vmatpush.msra.mxu0 0.0
        %446 = vmatpush.msra.mxu0 0.0
        %447 = vmatpush.msra.mxu0 0.0
        %448 = vmatpush.msra.mxu0 0.0
        %449 = vmatpush.msra.mxu0 0.0
        %450 = vmatpush.msra.mxu0 0.0
        %451 = vmatpush.msra.mxu0 0.0
        %452 = vmatpush.msra.mxu0 0.0
        %453 = vmatpush.msra.mxu0 0.0
        %454 = vmatpush.msra.mxu0 0.0
        %455 = vmatpush.msra.mxu0 0.0
        %456 = vmatpush.msra.mxu0 0.0
        %457 = vmatpush.msra.mxu0 %v346
        %458 = vmatpush.msra.mxu0 %v345
        %459 = vmatmul.f32.gmra.mxu0 %v391
        %v460 = vpop.f32.mrf.mxu0
        %v461 = vadd.f32 %v362, %v460
        %462 = vmatmul.f32.gmra.mxu0 %v394
        %v463 = vpop.f32.mrf.mxu0
        %v464 = vadd.f32 %v367, %v463
        %465 = vmatmul.f32.gmra.mxu0 %v397
        %v466 = vpop.f32.mrf.mxu0
        %v467 = vadd.f32 %v372, %v466
        %468 = vmatmul.f32.gmra.mxu0 %v400
        %v469 = vpop.f32.mrf.mxu0
        %v470 = vadd.f32 %v377, %v469
        %471 = vmatmul.f32.gmra.mxu0 %v403
        %v472 = vpop.f32.mrf.mxu0
        %v473 = vadd.f32 %v382, %v472
        %474 = vmatmul.f32.gmra.mxu0 %v406
        %v475 = vpop.f32.mrf.mxu0
        %v476 = vadd.f32 %v387, %v475
        %477 = vdwg.mxu0
        %v480 = vrot.slane %v426, 4
        %v481 = vrot.slane %v429, 4
        %v486 = vrot.slane %v461, 4
        %v487 = vrot.slane %v464, 4
        %v492 = vrot.slane %v432, 4
        %v493 = vrot.slane %v435, 4
        %v498 = vrot.slane %v467, 4
        %v499 = vrot.slane %v470, 4
        %v504 = vrot.slane %v438, 4
        %v505 = vrot.slane %v441, 4
        %v510 = vrot.slane %v473, 4
        %v511 = vrot.slane %v476, 4
        %v514 = vmul.f32 %v426, %v432
        %v515 = vmul.f32 %v480, %v492
        %v516 = vmul.f32 %v429, %v435
        %v517 = vmul.f32 %v481, %v493
        %vm518 = vcmask 1043456
        %v519 = vsel %vm518, %v514, 0.0
        %v520 = vrot.slane %v519, 4
        %v521 = vadd.f32 %v519, %v520
        %v522 = vrot.slane %v521, 2
        %v523 = vadd.f32 %v521, %v522
        %v524 = vrot.slane %v523, 1
        %v525 = vadd.f32 %v523, %v524
        %v526 = vsel %vm518, %v515, 0.0
        %v527 = vrot.slane %v526, 4
        %v528 = vadd.f32 %v526, %v527
        %v529 = vrot.slane %v528, 2
        %v530 = vadd.f32 %v528, %v529
        %v531 = vrot.slane %v530, 1
        %v532 = vadd.f32 %v530, %v531
        %v533 = vsel %vm518, %v516, 0.0
        %v534 = vrot.slane %v533, 4
        %v535 = vadd.f32 %v533, %v534
        %v536 = vrot.slane %v535, 2
        %v537 = vadd.f32 %v535, %v536
        %v538 = vrot.slane %v537, 1
        %v539 = vadd.f32 %v537, %v538
        %v540 = vsel %vm518, %v517, 0.0
        %v541 = vrot.slane %v540, 4
        %v542 = vadd.f32 %v540, %v541
        %v543 = vrot.slane %v542, 2
        %v544 = vadd.f32 %v542, %v543
        %v545 = vrot.slane %v544, 1
        %v546 = vadd.f32 %v544, %v545
        %v547 = vmul.f32 %v426, %v467
        %v548 = vmul.f32 %v480, %v498
        %v549 = vmul.f32 %v429, %v470
        %v550 = vmul.f32 %v481, %v499
        %v551 = vsel %vm518, %v547, 0.0
        %v552 = vrot.slane %v551, 4
        %v553 = vadd.f32 %v551, %v552
        %v554 = vrot.slane %v553, 2
        %v555 = vadd.f32 %v553, %v554
        %v556 = vrot.slane %v555, 1
        %v557 = vadd.f32 %v555, %v556
        %v558 = vsel %vm518, %v548, 0.0
        %v559 = vrot.slane %v558, 4
        %v560 = vadd.f32 %v558, %v559
        %v561 = vrot.slane %v560, 2
        %v562 = vadd.f32 %v560, %v561
        %v563 = vrot.slane %v562, 1
        %v564 = vadd.f32 %v562, %v563
        %v565 = vsel %vm518, %v549, 0.0
        %v566 = vrot.slane %v565, 4
        %v567 = vadd.f32 %v565, %v566
        %v568 = vrot.slane %v567, 2
        %v569 = vadd.f32 %v567, %v568
        %v570 = vrot.slane %v569, 1
        %v571 = vadd.f32 %v569, %v570
        %v572 = vsel %vm518, %v550, 0.0
        %v573 = vrot.slane %v572, 4
        %v574 = vadd.f32 %v572, %v573
        %v575 = vrot.slane %v574, 2
        %v576 = vadd.f32 %v574, %v575
        %v577 = vrot.slane %v576, 1
        %v578 = vadd.f32 %v576, %v577
        %v579 = vmax.f32 %v525, %v557
        %v580 = vmax.f32 %v532, %v564
        %v581 = vmax.f32 %v539, %v571
        %v582 = vmax.f32 %v546, %v578
        %v583 = vsub.f32 %v525, %v579
        %v584 = vsub.f32 %v532, %v580
        %v585 = vsub.f32 %v539, %v581
        %v586 = vsub.f32 %v546, %v582
        %v587 = vmul.f32 %v583, 1.442695
        %v588 = vpow.pop %v587
        %v589 = vmul.f32 %v584, 1.442695
        %v590 = vpow.pop %v589
        %v591 = vmul.f32 %v585, 1.442695
        %v592 = vpow.pop %v591
        %v593 = vmul.f32 %v586, 1.442695
        %v594 = vpow.pop %v593
        %v595 = vsub.f32 %v557, %v579
        %v596 = vsub.f32 %v564, %v580
        %v597 = vsub.f32 %v571, %v581
        %v598 = vsub.f32 %v578, %v582
        %v599 = vmul.f32 %v595, 1.442695
        %v600 = vpow.pop %v599
        %v601 = vmul.f32 %v596, 1.442695
        %v602 = vpow.pop %v601
        %v603 = vmul.f32 %v597, 1.442695
        %v604 = vpow.pop %v603
        %v605 = vmul.f32 %v598, 1.442695
        %v606 = vpow.pop %v605
        %v607 = vadd.f32 %v588, %v600
        %v608 = vadd.f32 %v590, %v602
        %v609 = vadd.f32 %v592, %v604
        %v610 = vadd.f32 %v594, %v606
        %v611 = vrcp.pop %v607
        %v612 = vrcp.pop %v608
        %v613 = vrcp.pop %v609
        %v614 = vrcp.pop %v610
        %v615 = vmul.f32 %v588, %v611
        %v616 = vmul.f32 %v590, %v612
        %v617 = vmul.f32 %v592, %v613
        %v618 = vmul.f32 %v594, %v614
        %v619 = vmul.f32 %v615, %v438
        %v620 = vmul.f32 %v616, %v504
        %v621 = vmul.f32 %v617, %v441
        %v622 = vmul.f32 %v618, %v505
        %v623 = vmul.f32 %v600, %v611
        %v624 = vmul.f32 %v602, %v612
        %v625 = vmul.f32 %v604, %v613
        %v626 = vmul.f32 %v606, %v614
        %v627 = vmul.f32 %v623, %v473
        %v628 = vmul.f32 %v624, %v510
        %v629 = vmul.f32 %v625, %v476
        %v630 = vmul.f32 %v626, %v511
        %v631 = vadd.f32 %v619, %v627
        %v632 = vadd.f32 %v620, %v628
        %v633 = vadd.f32 %v621, %v629
        %v634 = vadd.f32 %v622, %v630
        %v635 = vmul.f32 %v461, %v432
        %v636 = vmul.f32 %v486, %v492
        %v637 = vmul.f32 %v464, %v435
        %v638 = vmul.f32 %v487, %v493
        %v639 = vsel %vm518, %v635, 0.0
        %v640 = vrot.slane %v639, 4
        %v641 = vadd.f32 %v639, %v640
        %v642 = vrot.slane %v641, 2
        %v643 = vadd.f32 %v641, %v642
        %v644 = vrot.slane %v643, 1
        %v645 = vadd.f32 %v643, %v644
        %v646 = vsel %vm518, %v636, 0.0
        %v647 = vrot.slane %v646, 4
        %v648 = vadd.f32 %v646, %v647
        %v649 = vrot.slane %v648, 2
        %v650 = vadd.f32 %v648, %v649
        %v651 = vrot.slane %v650, 1
        %v652 = vadd.f32 %v650, %v651
        %v653 = vsel %vm518, %v637, 0.0
        %v654 = vrot.slane %v653, 4
        %v655 = vadd.f32 %v653, %v654
        %v656 = vrot.slane %v655, 2
        %v657 = vadd.f32 %v655, %v656
        %v658 = vrot.slane %v657, 1
        %v659 = vadd.f32 %v657, %v658
        %v660 = vsel %vm518, %v638, 0.0
        %v661 = vrot.slane %v660, 4
        %v662 = vadd.f32 %v660, %v661
        %v663 = vrot.slane %v662, 2
        %v664 = vadd.f32 %v662, %v663
        %v665 = vrot.slane %v664, 1
        %v666 = vadd.f32 %v664, %v665
        %v667 = vmul.f32 %v461, %v467
        %v668 = vmul.f32 %v486, %v498
        %v669 = vmul.f32 %v464, %v470
        %v670 = vmul.f32 %v487, %v499
        %v671 = vsel %vm518, %v667, 0.0
        %v672 = vrot.slane %v671, 4
        %v673 = vadd.f32 %v671, %v672
        %v674 = vrot.slane %v673, 2
        %v675 = vadd.f32 %v673, %v674
        %v676 = vrot.slane %v675, 1
        %v677 = vadd.f32 %v675, %v676
        %v678 = vsel %vm518, %v668, 0.0
        %v679 = vrot.slane %v678, 4
        %v680 = vadd.f32 %v678, %v679
        %v681 = vrot.slane %v680, 2
        %v682 = vadd.f32 %v680, %v681
        %v683 = vrot.slane %v682, 1
        %v684 = vadd.f32 %v682, %v683
        %v685 = vsel %vm518, %v669, 0.0
        %v686 = vrot.slane %v685, 4
        %v687 = vadd.f32 %v685, %v686
        %v688 = vrot.slane %v687, 2
        %v689 = vadd.f32 %v687, %v688
        %v690 = vrot.slane %v689, 1
        %v691 = vadd.f32 %v689, %v690
        %v692 = vsel %vm518, %v670, 0.0
        %v693 = vrot.slane %v692, 4
        %v694 = vadd.f32 %v692, %v693
        %v695 = vrot.slane %v694, 2
        %v696 = vadd.f32 %v694, %v695
        %v697 = vrot.slane %v696, 1
        %v698 = vadd.f32 %v696, %v697
        %v699 = vmax.f32 %v645, %v677
        %v700 = vmax.f32 %v652, %v684
        %v701 = vmax.f32 %v659, %v691
        %v702 = vmax.f32 %v666, %v698
        %v703 = vsub.f32 %v645, %v699
        %v704 = vsub.f32 %v652, %v700
        %v705 = vsub.f32 %v659, %v701
        %v706 = vsub.f32 %v666, %v702
        %v707 = vmul.f32 %v703, 1.442695
        %v708 = vpow.pop %v707
        %v709 = vmul.f32 %v704, 1.442695
        %v710 = vpow.pop %v709
        %v711 = vmul.f32 %v705, 1.442695
        %v712 = vpow.pop %v711
        %v713 = vmul.f32 %v706, 1.442695
        %v714 = vpow.pop %v713
        %v715 = vsub.f32 %v677, %v699
        %v716 = vsub.f32 %v684, %v700
        %v717 = vsub.f32 %v691, %v701
        %v718 = vsub.f32 %v698, %v702
        %v719 = vmul.f32 %v715, 1.442695
        %v720 = vpow.pop %v719
        %v721 = vmul.f32 %v716, 1.442695
        %v722 = vpow.pop %v721
        %v723 = vmul.f32 %v717, 1.442695
        %v724 = vpow.pop %v723
        %v725 = vmul.f32 %v718, 1.442695
        %v726 = vpow.pop %v725
        %v727 = vadd.f32 %v708, %v720
        %v728 = vadd.f32 %v710, %v722
        %v729 = vadd.f32 %v712, %v724
        %v730 = vadd.f32 %v714, %v726
        %v731 = vrcp.pop %v727
        %v732 = vrcp.pop %v728
        %v733 = vrcp.pop %v729
        %v734 = vrcp.pop %v730
        %v735 = vmul.f32 %v708, %v731
        %v736 = vmul.f32 %v710, %v732
        %v737 = vmul.f32 %v712, %v733
        %v738 = vmul.f32 %v714, %v734
        %v739 = vmul.f32 %v735, %v438
        %v740 = vmul.f32 %v736, %v504
        %v741 = vmul.f32 %v737, %v441
        %v742 = vmul.f32 %v738, %v505
        %v743 = vmul.f32 %v720, %v731
        %v744 = vmul.f32 %v722, %v732
        %v745 = vmul.f32 %v724, %v733
        %v746 = vmul.f32 %v726, %v734
        %v747 = vmul.f32 %v743, %v473
        %v748 = vmul.f32 %v744, %v510
        %v749 = vmul.f32 %v745, %v476
        %v750 = vmul.f32 %v746, %v511
        %v751 = vadd.f32 %v739, %v747
        %v752 = vadd.f32 %v740, %v748
        %v753 = vadd.f32 %v741, %v749
        %v754 = vadd.f32 %v742, %v750
        %759 = vst [vmem:[#allocation1] ss:$2 sm:$0xff] %v631
        %s760 = scalar_lea.vmem [#allocation1], 1
        %761 = vst [vmem:[%s760] ss:$2 sm:$0xff] %v632
        %s762 = scalar_lea.vmem [#allocation1], 16
        %763 = vst [vmem:[%s762] ss:$2 sm:$0xff] %v633
        %s764 = scalar_lea.vmem [#allocation1], 17
        %765 = vst [vmem:[%s764] ss:$2 sm:$0xff] %v634
        %v766 = vld.sshfl [vmem:[#allocation1] sm:$0xff pattern:$0x75316420]
        %v767 = vld.sshfl [vmem:[#allocation1 + $0x10] sm:$0xff pattern:$0x75316420]
        %774 = vst [vmem:[#allocation1] ss:$2 sm:$0xff] %v751
        %s775 = scalar_lea.vmem [#allocation1], 1
        %776 = vst [vmem:[%s775] ss:$2 sm:$0xff] %v752
        %s777 = scalar_lea.vmem [#allocation1], 16
        %778 = vst [vmem:[%s777] ss:$2 sm:$0xff] %v753
        %s779 = scalar_lea.vmem [#allocation1], 17
        %780 = vst [vmem:[%s779] ss:$2 sm:$0xff] %v754
        %v781 = vld.sshfl [vmem:[#allocation1] sm:$0xff pattern:$0x75316420]
        %v782 = vld.sshfl [vmem:[#allocation1 + $0x10] sm:$0xff pattern:$0x75316420]
        %v785 = vld [vmem:[%s4] sm:$0xff]
        %v786 = vld [vmem:[%s4 + $0x8] sm:$0xff]
        %v787 = vld [vmem:[%s4 + $0x10] sm:$0xff]
        %v788 = vld [vmem:[%s4 + $0x18] sm:$0xff]
        %v789 = vld [vmem:[%s3] sm:$0xff]
        %v790 = vld [vmem:[%s3 + $0x8] sm:$0xff]
        %v791 = vld [vmem:[%s3 + $0x10] sm:$0xff]
        %v792 = vld [vmem:[%s3 + $0x18] sm:$0xff]
        %794 = vset.pattern.permute.xlu0 0
        %795 = vperm.xlu0 %794, %v785
        %v796 = vpop.permute.xlu0 %795
        %799 = vset.pattern.permute.xlu0 0
        %800 = vperm.xlu0 %799, %v786
        %v801 = vpop.permute.xlu0 %800
        %804 = vset.pattern.permute.xlu0 0
        %805 = vperm.xlu0 %804, %v787
        %v806 = vpop.permute.xlu0 %805
        %809 = vset.pattern.permute.xlu0 0
        %810 = vperm.xlu0 %809, %v788
        %v811 = vpop.permute.xlu0 %810
        %v814 = vsel %vm389, %v789, 0
        %v817 = vsel %vm389, %v790, 0
        %v820 = vsel %vm389, %v791, 0
        %v823 = vsel %vm389, %v792, 0
        %825 = vmatpush.msra.mxu0 0.0
        %826 = vmatpush.msra.mxu0 0.0
        %827 = vmatpush.msra.mxu0 0.0
        %828 = vmatpush.msra.mxu0 0.0
        %829 = vmatpush.msra.mxu0 0.0
        %830 = vmatpush.msra.mxu0 0.0
        %831 = vmatpush.msra.mxu0 0.0
        %832 = vmatpush.msra.mxu0 0.0
        %833 = vmatpush.msra.mxu0 0.0
        %834 = vmatpush.msra.mxu0 0.0
        %835 = vmatpush.msra.mxu0 0.0
        %836 = vmatpush.msra.mxu0 0.0
        %837 = vmatpush.msra.mxu0 0.0
        %838 = vmatpush.msra.mxu0 0.0
        %839 = vmatpush.msra.mxu0 %v767
        %840 = vmatpush.msra.mxu0 %v766
        %841 = vmatmul.f32.gmra.mxu0 %v814
        %v842 = vpop.f32.mrf.mxu0
        %v843 = vadd.f32 %v796, %v842
        %844 = vmatmul.f32.gmra.mxu0 %v817
        %v845 = vpop.f32.mrf.mxu0
        %v846 = vadd.f32 %v801, %v845
        %847 = vmatmul.f32.gmra.mxu0 %v820
        %v848 = vpop.f32.mrf.mxu0
        %v849 = vadd.f32 %v806, %v848
        %850 = vmatmul.f32.gmra.mxu0 %v823
        %v851 = vpop.f32.mrf.mxu0
        %v852 = vadd.f32 %v811, %v851
        %853 = vdwg.mxu0
        %854 = vmatpush.msra.mxu0 0.0
        %855 = vmatpush.msra.mxu0 0.0
        %856 = vmatpush.msra.mxu0 0.0
        %857 = vmatpush.msra.mxu0 0.0
        %858 = vmatpush.msra.mxu0 0.0
        %859 = vmatpush.msra.mxu0 0.0
        %860 = vmatpush.msra.mxu0 0.0
        %861 = vmatpush.msra.mxu0 0.0
        %862 = vmatpush.msra.mxu0 0.0
        %863 = vmatpush.msra.mxu0 0.0
        %864 = vmatpush.msra.mxu0 0.0
        %865 = vmatpush.msra.mxu0 0.0
        %866 = vmatpush.msra.mxu0 0.0
        %867 = vmatpush.msra.mxu0 0.0
        %868 = vmatpush.msra.mxu0 %v782
        %869 = vmatpush.msra.mxu0 %v781
        %870 = vmatmul.f32.gmra.mxu0 %v814
        %v871 = vpop.f32.mrf.mxu0
        %v872 = vadd.f32 %v796, %v871
        %873 = vmatmul.f32.gmra.mxu0 %v817
        %v874 = vpop.f32.mrf.mxu0
        %v875 = vadd.f32 %v801, %v874
        %876 = vmatmul.f32.gmra.mxu0 %v820
        %v877 = vpop.f32.mrf.mxu0
        %v878 = vadd.f32 %v806, %v877
        %879 = vmatmul.f32.gmra.mxu0 %v823
        %v880 = vpop.f32.mrf.mxu0
        %v881 = vadd.f32 %v811, %v880
        %882 = vdwg.mxu0
        %v883 = vadd.f32 %v843, %v846
        %v884 = vadd.f32 %v883, %v849
        %v885 = vadd.f32 %v884, %v852
        %v886 = vrot.slane %v885, 4
        %v887 = vadd.f32 %v885, %v886
        %v888 = vrot.slane %v887, 2
        %v889 = vadd.f32 %v887, %v888
        %v890 = vrot.slane %v889, 1
        %v891 = vadd.f32 %v889, %v890
        %v892 = vadd.f32 %v872, %v875
        %v893 = vadd.f32 %v892, %v878
        %v894 = vadd.f32 %v893, %v881
        %v895 = vrot.slane %v894, 4
        %v896 = vadd.f32 %v894, %v895
        %v897 = vrot.slane %v896, 2
        %v898 = vadd.f32 %v896, %v897
        %v899 = vrot.slane %v898, 1
        %v900 = vadd.f32 %v898, %v899
        %v901 = vrcp.pop 32.0
        %v902 = vmul.f32 32.0, %v901
        %v903 = vsub.f32 1.0, %v902
        %v904 = vmul.f32 %v901, %v903
        %v905 = vadd.f32 %v901, %v904
        %vm906 = vweird.f32 %v901
        %v907 = vsel %vm906, %v901, %v905
        %v908 = vmul.f32 %v891, %v907
        %v909 = vmul.f32 %v900, %v907
        %v910 = vsub.f32 %v843, %v908
        %v911 = vsub.f32 %v872, %v909
        %v912 = vsub.f32 %v846, %v908
        %v913 = vsub.f32 %v875, %v909
        %v914 = vsub.f32 %v849, %v908
        %v915 = vsub.f32 %v878, %v909
        %v916 = vsub.f32 %v852, %v908
        %v917 = vsub.f32 %v881, %v909
        %v918 = vmul.f32 %v910, %v910
        %v919 = vmul.f32 %v911, %v911
        %v920 = vmul.f32 %v912, %v912
        %v921 = vmul.f32 %v913, %v913
        %v922 = vmul.f32 %v914, %v914
        %v923 = vmul.f32 %v915, %v915
        %v924 = vmul.f32 %v916, %v916
        %v925 = vmul.f32 %v917, %v917
        %v926 = vadd.f32 %v918, %v920
        %v927 = vadd.f32 %v926, %v922
        %v928 = vadd.f32 %v927, %v924
        %v929 = vrot.slane %v928, 4
        %v930 = vadd.f32 %v928, %v929
        %v931 = vrot.slane %v930, 2
        %v932 = vadd.f32 %v930, %v931
        %v933 = vrot.slane %v932, 1
        %v934 = vadd.f32 %v932, %v933
        %v935 = vadd.f32 %v919, %v921
        %v936 = vadd.f32 %v935, %v923
        %v937 = vadd.f32 %v936, %v925
        %v938 = vrot.slane %v937, 4
        %v939 = vadd.f32 %v937, %v938
        %v940 = vrot.slane %v939, 2
        %v941 = vadd.f32 %v939, %v940
        %v942 = vrot.slane %v941, 1
        %v943 = vadd.f32 %v941, %v942
        %v944 = vmul.f32 %v934, %v907
        %v945 = vmul.f32 %v943, %v907
        %v946 = vadd.f32 %v944, 1e-05
        %v947 = vadd.f32 %v945, 1e-05
        %v948 = vrsqrt.pop %v946
        %v949 = vmul.f32 %v948, %v946
        %v950 = vmul.f32 %v949, %v948
        %v951 = vmul.f32 0.5, %v950
        %v952 = vsub.f32 1.5, %v951
        %v953 = vmul.f32 %v948, %v952
        %vm954 = vweird.f32 %v946
        %vm955 = vweird.f32 %v948
        %vm956 = vmor %vm954, %vm955
        %v957 = vsel %vm956, %v948, %v953
        %v958 = vrsqrt.pop %v947
        %v959 = vmul.f32 %v958, %v947
        %v960 = vmul.f32 %v959, %v958
        %v961 = vmul.f32 0.5, %v960
        %v962 = vsub.f32 1.5, %v961
        %v963 = vmul.f32 %v958, %v962
        %vm964 = vweird.f32 %v947
        %vm965 = vweird.f32 %v958
        %vm966 = vmor %vm964, %vm965
        %v967 = vsel %vm966, %v958, %v963
        %v968 = vmul.f32 %v910, %v957
        %v969 = vmul.f32 %v911, %v967
        %v970 = vmul.f32 %v912, %v957
        %v971 = vmul.f32 %v913, %v967
        %v972 = vmul.f32 %v914, %v957
        %v973 = vmul.f32 %v915, %v967
        %v974 = vmul.f32 %v916, %v957
        %v975 = vmul.f32 %v917, %v967
        %976 = vset.pattern.permute.xlu0 1
        %977 = vperm.xlu0 %976, %v785
        %v978 = vpop.permute.xlu0 %977
        %980 = vset.pattern.permute.xlu0 1
        %981 = vperm.xlu0 %980, %v786
        %v982 = vpop.permute.xlu0 %981
        %984 = vset.pattern.permute.xlu0 1
        %985 = vperm.xlu0 %984, %v787
        %v986 = vpop.permute.xlu0 %985
        %988 = vset.pattern.permute.xlu0 1
        %989 = vperm.xlu0 %988, %v788
        %v990 = vpop.permute.xlu0 %989
        %v992 = vmul.f32 %v968, %v978
        %v993 = vmul.f32 %v969, %v978
        %v994 = vmul.f32 %v970, %v982
        %v995 = vmul.f32 %v971, %v982
        %v996 = vmul.f32 %v972, %v986
        %v997 = vmul.f32 %v973, %v986
        %v998 = vmul.f32 %v974, %v990
        %v999 = vmul.f32 %v975, %v990
        %1000 = vset.pattern.permute.xlu0 2
        %1001 = vperm.xlu0 %1000, %v785
        %v1002 = vpop.permute.xlu0 %1001
        %1004 = vset.pattern.permute.xlu0 2
        %1005 = vperm.xlu0 %1004, %v786
        %v1006 = vpop.permute.xlu0 %1005
        %1008 = vset.pattern.permute.xlu0 2
        %1009 = vperm.xlu0 %1008, %v787
        %v1010 = vpop.permute.xlu0 %1009
        %1012 = vset.pattern.permute.xlu0 2
        %1013 = vperm.xlu0 %1012, %v788
        %v1014 = vpop.permute.xlu0 %1013
        %v1016 = vadd.f32 %v992, %v1002
        %v1017 = vadd.f32 %v993, %v1002
        %v1018 = vadd.f32 %v994, %v1006
        %v1019 = vadd.f32 %v995, %v1006
        %v1020 = vadd.f32 %v996, %v1010
        %v1021 = vadd.f32 %v997, %v1010
        %v1022 = vadd.f32 %v998, %v1014
        %v1023 = vadd.f32 %v999, %v1014
        %1024 = vst [vmem:[%s269] sm:$0xff] %v1016
        %1025 = vst [vmem:[%s269 + $0x8] sm:$0xff] %v1018
        %1026 = vst [vmem:[%s269 + $0x10] sm:$0xff] %v1020
        %1027 = vst [vmem:[%s269 + $0x18] sm:$0xff] %v1022
        %s1028 = scalar_lea.vmem %s269, 32 [#allocation3]
        %1029 = vst [vmem:[%s1028] sm:$0xff] %v1017
        %1030 = vst [vmem:[%s1028 + $0x8] sm:$0xff] %v1019
        %1031 = vst [vmem:[%s1028 + $0x10] sm:$0xff] %v1021
        %1032 = vst [vmem:[%s1028 + $0x18] sm:$0xff] %v1023
        %s1033 = sand.u32 %s137, 1
        %s1034 = scalar_lea.sflag [#allocation4], %s1033
        %s1035 = sand.u32 %s137, 1
        %s1036 = smul.addr %s1035, 64
        %s1037 = scalar_lea.vmem [#allocation3], %s1036
        // Predicated region
        $region79: #{tpu_custom_call.1} parent=73 // pred_check
          %p1038 = pneg %p147
        $region80: #{tpu_custom_call.1} parent=73 // pred_check_branch
          %1040 = sbr.rel (%p1038) target = $region82
        $region81: #{tpu_custom_call.1} parent=73 // pred_region
          %1042 = vsyncadd %s1034, 0
          %s1043 = smul.addr %s19, 8
          %s1044 = scalar_lea.hbm %s5, %s1043
          %s1045 = sshll.u32 %s1037, 4
          %s1046 = int_to_ptr.vmem [resolvable:$true] %s1045
          %s1047 = sshll.u32 %s1044, 4
          %s1048 = int_to_ptr.hbm [resolvable:$true] %s1047
          %1053 = dma.vmem_to_hbm [thread:$0]  %s1046, 1024, %s1048, %s1034, 128, 256, 8
        $region82: #{tpu_custom_call.1} parent=73 // pred_fallthru
          _
      $region74: #{tpu_custom_call.1} parent=5 // pred_fallthru
        _
      %p1054 = scmp.le.s32.totalorder 2, %s14
      // Predicated region
      $region83: #{tpu_custom_call.1} parent=5 // pred_check
        %p1055 = pneg %p1054
      $region84: #{tpu_custom_call.1} parent=5 // pred_check_branch
        %1057 = sbr.rel (%p1055) target = $region86
      $region85: #{tpu_custom_call.1} parent=5 // pred_region
        %s1058 = ssub.s32 %s14, 2
        // Predicated region
        $region87: #{tpu_custom_call.1} parent=85 // pred_check
          %p1059 = pneg %p153
        $region88: #{tpu_custom_call.1} parent=85 // pred_check_branch
          %1061 = sbr.rel (%p1059) target = $region90
        $region89: #{tpu_custom_call.1} parent=85 // pred_region
          %s1062 = sand.u32 %s138, 1
          %s1063 = scalar_lea.sflag [#allocation4], %s1062
          %s1064 = sand.u32 %s138, 1
          %s1065 = smul.addr %s1064, 64
          %s1066 = scalar_lea.vmem [#allocation3], %s1065
          %1068 = dma.done %s1063, 1024
        $region90: #{tpu_custom_call.1} parent=85 // pred_fallthru
          _
      $region86: #{tpu_custom_call.1} parent=5 // pred_fallthru
        _
    $region6: #{tpu_custom_call.1} parent=1 // loop_footer
      %s18 = sadd.s32 1, %s14
    $region7: #{tpu_custom_call.1} parent=1 // loop_footer_branch
      %13 = sbr.rel target = $region3
    $region8: #{tpu_custom_call.1} parent=1 // loop_exit
      _
    %1069 = vsyncpa [#allocation4], 1
    %s1070 = scalar_lea.sflag [#allocation4], 1
    %1071 = vsyncpa %s1070, 1

</llo_original>
